<compile_context>
chip_gen: v7x
topology: tpu7x:2x2x1
jax: 0.10.0
libtpu: 0.0.40
codegen_flags: <defaults>
</compile_context>

<pallas_src>
import functools
import math

import jax
import jax.numpy as jnp
from jax import lax
from jax.experimental import pallas as pl
from jax.experimental.pallas import tpu as pltpu

_LANES = 128
_SCALE = 10.0 / math.log(10.0)  # 10 / ln(10), folded Python constant


def _snr_kernel(inp_ref, tgt_ref, out_ref, tgt_acc, err_acc,
                *, total_t, t_tile, mask_tail):
    """Grid = (row tiles, time tiles).  Accumulates lane-dense partial sums of
    target^2 and (input-target)^2 in f32 scratch; epilogue reduces + logs."""
    k = pl.program_id(1)  # time (reduction) axis, last grid dim
    nt = tgt_acc.shape[0]
    n_chunks = t_tile // _LANES

    @pl.when(k == 0)
    def _():
        tgt_acc[...] = jnp.zeros_like(tgt_acc)
        err_acc[...] = jnp.zeros_like(err_acc)

    if mask_tail:
        # Column index of each lane in the full (unpadded) signal; only the
        # final (partial) time tile actually masks anything.
        lane_iota = lax.broadcasted_iota(jnp.int32, (nt, _LANES), 1)
        t_base = k * t_tile

    def body(c, carry):
        tgt_part, err_part = carry
        lo = pl.multiple_of(c * _LANES, _LANES)
        # Per-chunk load + cast: fused into the VPU stream, no full-tile f32
        # materialisation (matters for bf16 inputs).
        xc = inp_ref[:, pl.ds(lo, _LANES)].astype(jnp.float32)
        tc = tgt_ref[:, pl.ds(lo, _LANES)].astype(jnp.float32)
        if mask_tail:
            valid = (t_base + lo + lane_iota) < total_t
            xc = jnp.where(valid, xc, 0.0)
            tc = jnp.where(valid, tc, 0.0)
        d = xc - tc
        return (tgt_part + tc * tc, err_part + d * d)

    tgt_part, err_part = lax.fori_loop(
        0, n_chunks, body, (tgt_acc[...], err_acc[...]),
        unroll=min(8, n_chunks))
    tgt_acc[...] = tgt_part
    err_acc[...] = err_part

    @pl.when(k == pl.num_programs(1) - 1)
    def _():
        # Single cross-lane reduce + logs per row tile.
        tgt_tot = jnp.sum(tgt_acc[...], axis=-1, keepdims=True)
        err_tot = jnp.sum(err_acc[...], axis=-1, keepdims=True)
        # -10*log10(tgt/err) == (10/ln10) * (ln(err) - ln(tgt))
        out_ref[...] = _SCALE * (jnp.log(err_tot) - jnp.log(tgt_tot))


def _per_row_neg_snr(inp2d, tgt2d, *, nt, tt):
    """inp2d/tgt2d: (N, T).  Returns (N, 1) f32 of -10*log10(SNR) per row.
    N and T need not be multiples of the tile sizes (no padding copies)."""
    n_rows, total_t = inp2d.shape
    grid = (pl.cdiv(n_rows, nt), pl.cdiv(total_t, tt))
    mask_tail = (total_t % tt) != 0

    kernel = functools.partial(
        _snr_kernel, total_t=total_t, t_tile=tt, mask_tail=mask_tail)

    return pl.pallas_call(
        kernel,
        out_shape=jax.ShapeDtypeStruct((n_rows, 1), jnp.float32),
        grid_spec=pltpu.PrefetchScalarGridSpec(
            num_scalar_prefetch=0,
            grid=grid,
            in_specs=[
                pl.BlockSpec((nt, tt), lambda r, k: (r, k)),
                pl.BlockSpec((nt, tt), lambda r, k: (r, k)),
            ],
            out_specs=pl.BlockSpec((nt, 1), lambda r, k: (r, 0)),
            scratch_shapes=[
                pltpu.VMEM((nt, _LANES), jnp.float32),  # sum target^2
                pltpu.VMEM((nt, _LANES), jnp.float32),  # sum (input-target)^2
            ],
        ),
        compiler_params=pltpu.CompilerParams(
            dimension_semantics=("parallel", "arbitrary"),
            vmem_limit_bytes=32 * 1024 * 1024,
        ),
    )(inp2d, tgt2d)


def _ceil_to(x, m):
    return ((x + m - 1) // m) * m


def snr_loss(input, target, reduction="mean", *, t_tile=16384, n_tile=16):
    """JAX/Pallas equivalent of SNRLoss.forward."""
    if reduction not in ["mean", "sum", None]:
        raise ValueError(
            f"'reduction' argument should be one of ['mean', 'sum', None], but was {reduction}"
        )
    assert input.shape == target.shape
    lead_shape = input.shape[:-1]
    total_t = input.shape[-1]

    inp2d = input.reshape(-1, total_t)
    tgt2d = target.reshape(-1, total_t)
    n_rows = inp2d.shape[0]

    itemsize = jnp.dtype(input.dtype).itemsize
    sub = {4: 8, 2: 16, 1: 32}.get(itemsize, 8)  # min sublane tile per dtype

    # Row tile: small (keeps both accumulators register resident and yields
    # >=2 row tiles for realistic N, so v7x's 2 TCs both get work), rounded to
    # the dtype's sublane multiple, never larger than the (rounded) row count.
    nt = min(_ceil_to(n_tile, sub), _ceil_to(max(n_rows, 1), sub))

    # Time tile: multiple of 128, as large as the signal (up to t_tile),
    # capped so each pipelined input tile stays within a ~3 MiB budget
    # (2 inputs x 2 buffers -> <= ~12 MiB, under every generation's scoped
    # VMEM default and well under the explicit 32 MiB limit we request).
    tt = min(_ceil_to(t_tile, _LANES), _ceil_to(total_t, _LANES))
    max_tile_bytes = 3 << 20
    cap = max(_LANES, ((max_tile_bytes // (nt * itemsize)) // _LANES) * _LANES)
    tt = min(tt, cap)

    neg_log_ratio = _per_row_neg_snr(inp2d, tgt2d, nt=nt, tt=tt)  # (n_rows, 1)
    neg_log_ratio = neg_log_ratio[:, 0].reshape(lead_shape)

    if reduction == "mean":
        return jnp.mean(neg_log_ratio)
    elif reduction == "sum":
        return jnp.sum(neg_log_ratio)
    else:
        return neg_log_ratio


if __name__ == "__main__":
    key = jax.random.PRNGKey(0)
    k1, k2, k3, k4 = jax.random.split(key, 4)

    # --- test 1: nicely-shaped input (batch=2, channels=4, T=256) ---
    B, C, T = 2, 4, 256
    target = jax.random.normal(k1, (B, C, T), dtype=jnp.float32)
    noise = 0.1 * jax.random.normal(k2, (B, C, T), dtype=jnp.float32)
    inp = target + noise  # "denoised" signal = clean + small residual

    out_mean = jax.block_until_ready(snr_loss(inp, target, reduction="mean"))
    out_sum = jax.block_until_ready(snr_loss(inp, target, reduction="sum"))
    out_none = jax.block_until_ready(snr_loss(inp, target, reduction=None))

    ratio = jnp.sum(target ** 2, axis=-1) / jnp.sum((inp - target) ** 2, axis=-1)
    log_ratio = 10.0 * jnp.log10(ratio)
    assert out_none.shape == (B, C)
    assert jnp.allclose(out_mean, -jnp.mean(log_ratio), rtol=1e-5, atol=1e-5)
    assert jnp.allclose(out_sum, -jnp.sum(log_ratio), rtol=1e-5, atol=1e-5)
    assert jnp.allclose(out_none, -log_ratio, rtol=1e-5, atol=1e-5)

    # --- test 2: ragged shapes (N=5 rows, T=200) exercising the in-kernel
    #             tail masking + partial row tile (no padding copies) ---
    N2, T2 = 5, 200
    target2 = jax.random.normal(k3, (N2, T2), dtype=jnp.float32)
    inp2 = target2 + 0.2 * jax.random.normal(k4, (N2, T2), dtype=jnp.float32)
    out2 = jax.block_until_ready(snr_loss(inp2, target2, reduction=None))
    ratio2 = jnp.sum(target2 ** 2, axis=-1) / jnp.sum((inp2 - target2) ** 2, axis=-1)
    assert out2.shape == (N2,)
    assert jnp.allclose(out2, -10.0 * jnp.log10(ratio2), rtol=1e-5, atol=1e-5)

    # --- test 3: bf16 smoke test (f32 accumulation in-kernel) ---
    tgt_bf = target.astype(jnp.bfloat16)
    inp_bf = inp.astype(jnp.bfloat16)
    out_bf = jax.block_until_ready(snr_loss(inp_bf, tgt_bf, reduction=None))
    assert out_bf.shape == (B, C)
    assert bool(jnp.all(jnp.isfinite(out_bf)))

    print("KERNEL_OK")
</pallas_src>

<mosaic_0001>
module attributes {stable_mosaic.version = 11 : i64} {
  func.func @_snr_kernel(%arg0: i32, %arg1: i32, %arg2: memref<8x256xf32, #tpu.memory_space<vmem>>, %arg3: memref<8x256xf32, #tpu.memory_space<vmem>>, %arg4: memref<8x1xf32, #tpu.memory_space<vmem>>, %arg5: memref<8x128xf32, #tpu.memory_space<vmem>>, %arg6: memref<8x128xf32, #tpu.memory_space<vmem>>) attributes {dimension_semantics = [#tpu.dimension_semantics<parallel>, #tpu.dimension_semantics<arbitrary>], iteration_bounds = array<i64: 1, 1>, scalar_prefetch = 0 : i64, scratch_operands = 2 : i64, tpu.core_type = #tpu.core_type<tc>, window_params = [{transform_indices = @transform_0, window_bounds = array<i64: 8, 256>}, {transform_indices = @transform_1, window_bounds = array<i64: 8, 256>}, {transform_indices = @transform_2, window_bounds = array<i64: 8, 1>}]} {
    %c0_i32 = arith.constant 0 : i32
    %0 = arith.cmpi eq, %arg1, %c0_i32 : i32
    %1 = arith.extui %0 : i1 to i32
    %c0_i32_0 = arith.constant 0 : i32
    %2 = arith.cmpi ne, %1, %c0_i32_0 : i32
    scf.if %2 {
      %cst = arith.constant 0.000000e+00 : f32
      %32 = vector.broadcast %cst : f32 to vector<8x128xf32>
      %c0_16 = arith.constant 0 : index
      %c0_17 = arith.constant 0 : index
      %33 = vector.load %arg5[%c0_16, %c0_17] : memref<8x128xf32, #tpu.memory_space<vmem>>, vector<8x128xf32>
      tpu.vector_store %arg5[%c0_16, %c0_17], %32 {strides = array<i32>} : memref<8x128xf32, #tpu.memory_space<vmem>>, vector<8x128xf32>,
      %cst_18 = arith.constant 0.000000e+00 : f32
      %34 = vector.broadcast %cst_18 : f32 to vector<8x128xf32>
      %c0_19 = arith.constant 0 : index
      %c0_20 = arith.constant 0 : index
      %35 = vector.load %arg6[%c0_19, %c0_20] : memref<8x128xf32, #tpu.memory_space<vmem>>, vector<8x128xf32>
      tpu.vector_store %arg6[%c0_19, %c0_20], %34 {strides = array<i32>} : memref<8x128xf32, #tpu.memory_space<vmem>>, vector<8x128xf32>,
    } else {
    }
    %c0 = arith.constant 0 : index
    %c0_1 = arith.constant 0 : index
    %3 = vector.load %arg5[%c0, %c0_1] : memref<8x128xf32, #tpu.memory_space<vmem>>, vector<8x128xf32>
    %c0_2 = arith.constant 0 : index
    %c0_3 = arith.constant 0 : index
    %4 = vector.load %arg6[%c0_2, %c0_3] : memref<8x128xf32, #tpu.memory_space<vmem>>, vector<8x128xf32>
    %c0_i32_4 = arith.constant 0 : i32
    %c128_i32 = arith.constant 128 : i32
    %5 = arith.muli %c0_i32_4, %c128_i32 : i32
    %6 = tpu.assume_multiple %5, 128 : i32
    %c0_5 = arith.constant 0 : index
    %7 = arith.index_cast %6 : i32 to index
    %8 = vector.load %arg2[%c0_5, %7] : memref<8x256xf32, #tpu.memory_space<vmem>>, vector<8x128xf32>
    %c0_6 = arith.constant 0 : index
    %9 = arith.index_cast %6 : i32 to index
    %10 = vector.load %arg3[%c0_6, %9] : memref<8x256xf32, #tpu.memory_space<vmem>>, vector<8x128xf32>
    %11 = arith.subf %8, %10 : vector<8x128xf32>
    %12 = arith.mulf %10, %10 : vector<8x128xf32>
    %13 = arith.addf %3, %12 : vector<8x128xf32>
    %14 = arith.mulf %11, %11 : vector<8x128xf32>
    %15 = arith.addf %4, %14 : vector<8x128xf32>
    %c1_i32 = arith.constant 1 : i32
    %c128_i32_7 = arith.constant 128 : i32
    %16 = arith.muli %c1_i32, %c128_i32_7 : i32
    %17 = tpu.assume_multiple %16, 128 : i32
    %c0_8 = arith.constant 0 : index
    %18 = arith.index_cast %17 : i32 to index
    %19 = vector.load %arg2[%c0_8, %18] : memref<8x256xf32, #tpu.memory_space<vmem>>, vector<8x128xf32>
    %c0_9 = arith.constant 0 : index
    %20 = arith.index_cast %17 : i32 to index
    %21 = vector.load %arg3[%c0_9, %20] : memref<8x256xf32, #tpu.memory_space<vmem>>, vector<8x128xf32>
    %22 = arith.subf %19, %21 : vector<8x128xf32>
    %23 = arith.mulf %21, %21 : vector<8x128xf32>
    %24 = arith.addf %13, %23 : vector<8x128xf32>
    %25 = arith.mulf %22, %22 : vector<8x128xf32>
    %26 = arith.addf %15, %25 : vector<8x128xf32>
    %c2_i32 = arith.constant 2 : i32
    %c0_10 = arith.constant 0 : index
    %c0_11 = arith.constant 0 : index
    %27 = vector.load %arg5[%c0_10, %c0_11] : memref<8x128xf32, #tpu.memory_space<vmem>>, vector<8x128xf32>
    tpu.vector_store %arg5[%c0_10, %c0_11], %24 {strides = array<i32>} : memref<8x128xf32, #tpu.memory_space<vmem>>, vector<8x128xf32>,
    %c0_12 = arith.constant 0 : index
    %c0_13 = arith.constant 0 : index
    %28 = vector.load %arg6[%c0_12, %c0_13] : memref<8x128xf32, #tpu.memory_space<vmem>>, vector<8x128xf32>
    tpu.vector_store %arg6[%c0_12, %c0_13], %26 {strides = array<i32>} : memref<8x128xf32, #tpu.memory_space<vmem>>, vector<8x128xf32>,
    %c0_i32_14 = arith.constant 0 : i32
    %29 = arith.cmpi eq, %arg1, %c0_i32_14 : i32
    %30 = arith.extui %29 : i1 to i32
    %c0_i32_15 = arith.constant 0 : i32
    %31 = arith.cmpi ne, %30, %c0_i32_15 : i32
    scf.if %31 {
      %c0_16 = arith.constant 0 : index
      %c0_17 = arith.constant 0 : index
      %32 = vector.load %arg5[%c0_16, %c0_17] : memref<8x128xf32, #tpu.memory_space<vmem>>, vector<8x128xf32>
      %cst = arith.constant dense<0.000000e+00> : vector<8xf32>
      %33 = vector.multi_reduction <add>, %32, %cst [1] : vector<8x128xf32> to vector<8xf32>
      %34 = vector.shape_cast %33 : vector<8xf32> to vector<8x1xf32>
      %c0_18 = arith.constant 0 : index
      %c0_19 = arith.constant 0 : index
      %35 = vector.load %arg6[%c0_18, %c0_19] : memref<8x128xf32, #tpu.memory_space<vmem>>, vector<8x128xf32>
      %cst_20 = arith.constant dense<0.000000e+00> : vector<8xf32>
      %36 = vector.multi_reduction <add>, %35, %cst_20 [1] : vector<8x128xf32> to vector<8xf32>
      %37 = vector.shape_cast %36 : vector<8xf32> to vector<8x1xf32>
      %38 = math.log %37 : vector<8x1xf32>
      %39 = math.log %34 : vector<8x1xf32>
      %40 = arith.subf %38, %39 : vector<8x1xf32>
      %cst_21 = arith.constant 4.34294462 : f32
      %41 = vector.broadcast %cst_21 : f32 to vector<8x1xf32>
      %42 = arith.mulf %41, %40 : vector<8x1xf32>
      %c0_22 = arith.constant 0 : index
      %c0_23 = arith.constant 0 : index
      %43 = vector.load %arg4[%c0_22, %c0_23] : memref<8x1xf32, #tpu.memory_space<vmem>>, vector<8x1xf32>
      tpu.vector_store %arg4[%c0_22, %c0_23], %42 {strides = array<i32>} : memref<8x1xf32, #tpu.memory_space<vmem>>, vector<8x1xf32>,
    } else {
    }
    return
  }
  func.func @transform_0(%arg0: i32, %arg1: i32) -> (i32, i32) {
    %c0_i32 = arith.constant 0 : i32
    return %arg0, %arg1 : i32, i32
  }
  func.func @transform_1(%arg0: i32, %arg1: i32) -> (i32, i32) {
    %c0_i32 = arith.constant 0 : i32
    return %arg0, %arg1 : i32, i32
  }
  func.func @transform_2(%arg0: i32, %arg1: i32) -> (i32, i32) {
    %c0_i32 = arith.constant 0 : i32
    %c0_i32_0 = arith.constant 0 : i32
    return %arg0, %c0_i32 : i32, i32
  }
}

</mosaic_0001>

<llo_original>
// kernel: tpu_custom_call.1
$region0: #{tpu_custom_call.1}
  #allocation0 [shape = 'u32[]', space=smem, size = 0x4, offset = 0x4, fixed_abs, tag = 'smem constant byte address 0x4 - core index']
  #allocation1 [shape = 'u32[144,128]{1,0:T(1,128)}', space=vmem, size = 0x12000, scoped, tag = 'internal scratch']
  #allocation2 [shape = 'f32[8,128]{1,0:T(8,128)}', space=vmem, size = 0x1000, scoped, tag = 'scratch operand']
  #allocation3 [shape = 'f32[8,128]{1,0:T(8,128)}', space=vmem, size = 0x1000, scoped, tag = 'scratch operand']
  %s0 = inlined_call_operand.hbm [shape: f32[8,256], index: 0, kind: input, shape index: {}]
  %s1 = inlined_call_operand.hbm [shape: f32[8,256], index: 1, kind: input, shape index: {}]
  %s2 = inlined_call_operand.vmem [shape: f32[8,1], index: 2, kind: output, shape index: {}]
  %s3 = sld [smem:[#allocation0]]
  $region34: #{tpu_custom_call.1} parent=0
    _
  %s5 = ssub.s32 1, %s3
  %s6 = scalar_select 0, %s5, %s3
  $region1: #{tpu_custom_call.1} parent=0
    #allocation4 [shape = 'u8[8192]{0}', space=vmem, size = 0x2000, scoped, tag = 'input window, operand 0, single buffered']
    #allocation5 [shape = 's32[1]{0}', space=sflag, size = 0x4, scoped, tag = 'scoped memory for tpu_custom_call.1']
    #allocation6 [shape = 'u8[8192]{0}', space=vmem, size = 0x2000, scoped, tag = 'input window, operand 1, single buffered']
    #allocation7 [shape = 's32[1]{0}', space=sflag, size = 0x4, scoped, tag = 'scoped memory for tpu_custom_call.1']
    %7 = vsyncpa [#allocation5], 0
    %8 = vsyncpa [#allocation7], 0
    // Predicated region
    $region2: #{tpu_custom_call.1} parent=1 // pred_check
      _
    $region3: #{tpu_custom_call.1} parent=1 // pred_check_branch
      %10 = sbr.rel (0) target = $region5
    $region4: #{tpu_custom_call.1} parent=1 // pred_region
      %s12 = ssub.s32 256, 256
      %13 = vsyncadd [#allocation5], %s12
      %s15 = sshll.u32 [#allocation4], 4
      %s16 = int_to_ptr.vmem [resolvable:$true] %s15
      %18 = dma.hbm_to_vmem [thread:$0]  %s0, 256, %s16, [#allocation5]
    $region5: #{tpu_custom_call.1} parent=1 // pred_fallthru
      _
    // Predicated region
    $region6: #{tpu_custom_call.1} parent=1 // pred_check
      _
    $region7: #{tpu_custom_call.1} parent=1 // pred_check_branch
      %20 = sbr.rel (0) target = $region9
    $region8: #{tpu_custom_call.1} parent=1 // pred_region
      %s22 = ssub.s32 256, 256
      %23 = vsyncadd [#allocation7], %s22
      %s25 = sshll.u32 [#allocation6], 4
      %s26 = int_to_ptr.vmem [resolvable:$true] %s25
      %28 = dma.hbm_to_vmem [thread:$0]  %s1, 256, %s26, [#allocation7]
    $region9: #{tpu_custom_call.1} parent=1 // pred_fallthru
      _
    // Predicated region
    $region10: #{tpu_custom_call.1} parent=1 // pred_check
      _
    $region11: #{tpu_custom_call.1} parent=1 // pred_check_branch
      %30 = sbr.rel (0) target = $region13
    $region12: #{tpu_custom_call.1} parent=1 // pred_region
      %31 = dma.done [#allocation5], 256
    $region13: #{tpu_custom_call.1} parent=1 // pred_fallthru
      _
    // Predicated region
    $region14: #{tpu_custom_call.1} parent=1 // pred_check
      _
    $region15: #{tpu_custom_call.1} parent=1 // pred_check_branch
      %33 = sbr.rel (0) target = $region17
    $region16: #{tpu_custom_call.1} parent=1 // pred_region
      %34 = dma.done [#allocation7], 256
    $region17: #{tpu_custom_call.1} parent=1 // pred_fallthru
      _
    %p35 = scmp.eq.s32.totalorder 0, 0
    // Predicated region
    $region18: #{tpu_custom_call.1} parent=1 // pred_check
      %p36 = pneg %p35
    $region19: #{tpu_custom_call.1} parent=1 // pred_check_branch
      %38 = sbr.rel (%p36) target = $region21
    $region20: #{tpu_custom_call.1} parent=1 // pred_region
      %39 = vst [vmem:[#allocation2] sm:$0xff] 0.0
      %40 = vst [vmem:[#allocation3] sm:$0xff] 0.0
    $region21: #{tpu_custom_call.1} parent=1 // pred_fallthru
      _
    %v41 = vld [vmem:[#allocation2] sm:$0xff]
    %v42 = vld [vmem:[#allocation3] sm:$0xff]
    %v43 = vld [vmem:[#allocation4] sm:$0xff]
    %v44 = vld [vmem:[#allocation6] sm:$0xff]
    %v45 = vsub.f32 %v43, %v44
    %v46 = vmul.f32 %v44, %v44
    %v47 = vadd.f32 %v41, %v46
    %v48 = vmul.f32 %v45, %v45
    %v49 = vadd.f32 %v42, %v48
    %s50 = scalar_lea.vmem [#allocation4], 8
    %v51 = vld [vmem:[%s50] sm:$0xff]
    %s52 = scalar_lea.vmem [#allocation6], 8
    %v53 = vld [vmem:[%s52] sm:$0xff]
    %v54 = vsub.f32 %v51, %v53
    %v55 = vmul.f32 %v53, %v53
    %v56 = vadd.f32 %v47, %v55
    %v57 = vmul.f32 %v54, %v54
    %v58 = vadd.f32 %v49, %v57
    %59 = vst [vmem:[#allocation2] sm:$0xff] %v56
    %60 = vst [vmem:[#allocation3] sm:$0xff] %v58
    // Predicated region
    $region22: #{tpu_custom_call.1} parent=1 // pred_check
      %p61 = pneg %p35
    $region23: #{tpu_custom_call.1} parent=1 // pred_check_branch
      %63 = sbr.rel (%p61) target = $region25
    $region24: #{tpu_custom_call.1} parent=1 // pred_region
      %v64 = vld [vmem:[#allocation2] sm:$0xff]
      %65 = vadd.xlane.f32.xlu0 %v64
      %v66 = vpop.xlane.xlu0 %65
      %v67 = vld [vmem:[#allocation3] sm:$0xff]
      %68 = vadd.xlane.f32.xlu0 %v67
      %v69 = vpop.xlane.xlu0 %68
      %v70 = vlog2.pop %v69
      %v71 = vmul.f32 %v70, 0.6931472
      %v72 = vlog2.pop %v66
      %v73 = vmul.f32 %v72, 0.6931472
      %v74 = vsub.f32 %v71, %v73
      %v75 = vmul.f32 %v74, 4.3429446
      %vm76 = vcmask 7168
      %77 = vst.msk [vmem:[%s2] sm:$0xff] %vm76, %v75
    $region25: #{tpu_custom_call.1} parent=1 // pred_fallthru
      _
    // Predicated region
    $region26: #{tpu_custom_call.1} parent=1 // pred_check
      _
    $region27: #{tpu_custom_call.1} parent=1 // pred_check_branch
      %79 = sbr.rel (0) target = $region29
    $region28: #{tpu_custom_call.1} parent=1 // pred_region
      _
    $region29: #{tpu_custom_call.1} parent=1 // pred_fallthru
      _
    // Predicated region
    $region30: #{tpu_custom_call.1} parent=1 // pred_check
      _
    $region31: #{tpu_custom_call.1} parent=1 // pred_check_branch
      %81 = sbr.rel (0) target = $region33
    $region32: #{tpu_custom_call.1} parent=1 // pred_region
      _
    $region33: #{tpu_custom_call.1} parent=1 // pred_fallthru
      _
    %82 = vsyncpa [#allocation5], 1
    %83 = vsyncpa [#allocation7], 1

</llo_original>
